<compile_context>
chip_gen: v6e
topology: v6e:2x2x1
jax: 0.10.0
libtpu: 0.0.40
codegen_flags: <defaults>
</compile_context>

<pallas_src>
import functools

import jax
import jax.numpy as jnp
from jax.experimental import pallas as pl
from jax.experimental.pallas import tpu as pltpu

_HIDDEN = 64
_MIN_SPLIT_ROWS = 256   # batches >= 2*this are split into >= 2 grid steps (v7x: 2 TCs)


def _round_up(v, m):
    return -(-v // m) * m


def _mlp_kernel(x_ref, w1_ref, b1_ref, w2_ref, b2_ref, w3_ref, b3_ref, o_ref):
    # x arrives as f32; cast to bf16 in-kernel (VPU cast is hidden under MXU/DMA).
    x = x_ref[...].astype(jnp.bfloat16)

    h1 = jnp.dot(x, w1_ref[...], preferred_element_type=jnp.float32) + b1_ref[...]
    h1 = jnp.maximum(h1, 0.0).astype(jnp.bfloat16)

    h2 = jnp.dot(h1, w2_ref[...], preferred_element_type=jnp.float32) + b2_ref[...]
    h2 = jnp.maximum(h2, 0.0).astype(jnp.bfloat16)

    y = jnp.dot(h2, w3_ref[...], preferred_element_type=jnp.float32) + b3_ref[...]
    o_ref[...] = y.astype(o_ref.dtype)


def _choose_tile_b(B, tile_b):
    """Batch tile: large (amortizes ~0.35us/grid-step), minimal tail padding,
    multiple of 16 (bf16 sublane packing), >= 2 grid steps for large batches."""
    B8 = _round_up(B, 8)
    if B8 >= 2 * _MIN_SPLIT_ROWS:
        half = _round_up(-(-B8 // 2), 16)          # ceil(B8/2) rounded to 16
        tb = min(int(tile_b), half)
        tb = max(16, (tb // 16) * 16)
    else:
        tb = B8                                    # single tile, minimal padding
    B_p = _round_up(B, tb)
    return tb, B_p


@functools.partial(jax.jit, static_argnames=("tile_b",))
def conditional_transform(x, params, tile_b=2048):
    """x: (..., Ni) float32. params: dict with w1,b1,w2,b2,w3,b3 (weights stored (in,out))."""
    w1, b1, w2, b2, w3, b3 = (params["w1"], params["b1"], params["w2"],
                              params["b2"], params["w3"], params["b3"])
    orig_shape = x.shape
    Ni = orig_shape[-1]
    x2 = x.reshape(-1, Ni)
    B = x2.shape[0]
    H = w1.shape[1]
    No = w3.shape[1]

    # --- adaptive batch tiling (minimal tail padding) ---
    tb, B_p = _choose_tile_b(B, tile_b)
    x_p = x2 if B_p == B else jnp.zeros((B_p, Ni), x2.dtype).at[:B].set(x2)

    # Weights are tiny; one-time bf16 cast in the wrapper is negligible.
    w1_bf = w1.astype(jnp.bfloat16)
    w2_bf = w2.astype(jnp.bfloat16)
    w3_bf = w3.astype(jnp.bfloat16)
    b1_f = b1.reshape(1, H).astype(jnp.float32)
    b2_f = b2.reshape(1, H).astype(jnp.float32)
    b3_f = b3.reshape(1, No).astype(jnp.float32)

    grid = (B_p // tb,)
    const_spec = lambda shape: pl.BlockSpec(shape, lambda i: (0, 0))  # VMEM-resident

    flops = 2 * B_p * (Ni * H + H * H + H * No)
    bytes_accessed = (
        B_p * Ni * 4                        # x (f32)
        + B_p * No * 4                      # out (f32, un-padded)
        + (Ni * H + H * H + H * No) * 2     # weights (bf16)
        + (2 * H + No) * 4                  # biases (f32)
    )
    # Real VMEM working set: double-buffered x/out tiles, resident weights/biases
    # (default double-buffering counted), activation scratch; 2x headroom, clamp [8,32] MiB.
    vmem_need = (
        2 * tb * Ni * 4 + 2 * tb * No * 4
        + 2 * (Ni * H + H * H + H * No) * 2 + 2 * (2 * H + No) * 4
        + 6 * tb * H * 4
    )
    vmem_limit = int(min(32 * 1024 * 1024, max(8 * 1024 * 1024, 2 * vmem_need)))

    out_p = pl.pallas_call(
        _mlp_kernel,
        out_shape=jax.ShapeDtypeStruct((B_p, No), jnp.float32),
        grid=grid,
        in_specs=[
            pl.BlockSpec((tb, Ni), lambda i: (i, 0)),   # x: tiled over batch
            const_spec(w1_bf.shape), const_spec(b1_f.shape),
            const_spec(w2_bf.shape), const_spec(b2_f.shape),
            const_spec(w3_bf.shape), const_spec(b3_f.shape),
        ],
        out_specs=pl.BlockSpec((tb, No), lambda i: (i, 0)),
        compiler_params=pltpu.CompilerParams(
            dimension_semantics=("parallel",),
            vmem_limit_bytes=vmem_limit,
        ),
        cost_estimate=pl.CostEstimate(
            flops=int(flops), transcendentals=0, bytes_accessed=int(bytes_accessed)
        ),
    )(x_p, w1_bf, b1_f, w2_bf, b2_f, w3_bf, b3_f)

    out = out_p if B_p == B else out_p[:B]
    return out.reshape(*orig_shape[:-1], No)


def init_params(key, Ni, No, hidden=_HIDDEN):
    # Deterministic synthetic init (PyTorch-Linear-like uniform ranges).
    ks = jax.random.split(key, 6)

    def lin(kw, kb, fan_in, fan_out):
        bound = 1.0 / jnp.sqrt(fan_in)
        w = jax.random.uniform(kw, (fan_in, fan_out), jnp.float32, -bound, bound)
        b = jax.random.uniform(kb, (1, fan_out), jnp.float32, -bound, bound)
        return w, b

    w1, b1 = lin(ks[0], ks[1], Ni, hidden)
    w2, b2 = lin(ks[2], ks[3], hidden, hidden)
    w3, b3 = lin(ks[4], ks[5], hidden, No)
    return {"w1": w1, "b1": b1, "w2": w2, "b2": b2, "w3": w3, "b3": b3}


def reference(x, p):
    h1 = jnp.maximum(x @ p["w1"] + p["b1"], 0.0)
    h2 = jnp.maximum(h1 @ p["w2"] + p["b2"], 0.0)
    return h2 @ p["w3"] + p["b3"]


if __name__ == "__main__":
    key = jax.random.PRNGKey(0)
    k_x, k_p, k_x2, k_p2 = jax.random.split(key, 4)

    # Small case (module spec: Ni -> 64 -> ReLU -> 64 -> ReLU -> No).
    B, Ni, No = 8, 32, 16
    x = jax.random.normal(k_x, (B, Ni), jnp.float32)
    params = init_params(k_p, Ni, No)
    out = jax.block_until_ready(conditional_transform(x, params))
    ref = reference(x, params)
    assert out.shape == (B, No)
    # bf16 matmuls with f32 accumulation -> loosened tolerance vs the f32 reference.
    assert jnp.allclose(out, ref, atol=2e-2, rtol=2e-2), "mismatch vs reference (small)"

    # Larger ragged case: exercises multi-step grid, tail padding, narrow un-padded No.
    B2, Ni2, No2 = 600, 48, 10
    x2 = jax.random.normal(k_x2, (B2, Ni2), jnp.float32)
    params2 = init_params(k_p2, Ni2, No2)
    out2 = jax.block_until_ready(conditional_transform(x2, params2))
    ref2 = reference(x2, params2)
    assert out2.shape == (B2, No2)
    assert jnp.allclose(out2, ref2, atol=2e-2, rtol=2e-2), "mismatch vs reference (large)"

    print("KERNEL_OK")
</pallas_src>

<mosaic_0001>
module attributes {stable_mosaic.version = 11 : i64} {
  func.func @_mlp_kernel(%arg0: i32, %arg1: memref<8x32xf32, #tpu.memory_space<vmem>>, %arg2: memref<32x64xbf16, #tpu.memory_space<vmem>>, %arg3: memref<1x64xf32, #tpu.memory_space<vmem>>, %arg4: memref<64x64xbf16, #tpu.memory_space<vmem>>, %arg5: memref<1x64xf32, #tpu.memory_space<vmem>>, %arg6: memref<64x16xbf16, #tpu.memory_space<vmem>>, %arg7: memref<1x16xf32, #tpu.memory_space<vmem>>, %arg8: memref<8x16xf32, #tpu.memory_space<vmem>>) attributes {dimension_semantics = [#tpu.dimension_semantics<parallel>], iteration_bounds = array<i64: 1>, scalar_prefetch = 0 : i64, scratch_operands = 0 : i64, tpu.core_type = #tpu.core_type<tc>, window_params = [{transform_indices = @transform_0, window_bounds = array<i64: 8, 32>}, {pipeline_mode = #tpu.pipeline_mode<synchronous>, transform_indices = @transform_1, window_bounds = array<i64: 32, 64>}, {pipeline_mode = #tpu.pipeline_mode<synchronous>, transform_indices = @transform_2, window_bounds = array<i64: 1, 64>}, {pipeline_mode = #tpu.pipeline_mode<synchronous>, transform_indices = @transform_3, window_bounds = array<i64: 64, 64>}, {pipeline_mode = #tpu.pipeline_mode<synchronous>, transform_indices = @transform_4, window_bounds = array<i64: 1, 64>}, {pipeline_mode = #tpu.pipeline_mode<synchronous>, transform_indices = @transform_5, window_bounds = array<i64: 64, 16>}, {pipeline_mode = #tpu.pipeline_mode<synchronous>, transform_indices = @transform_6, window_bounds = array<i64: 1, 16>}, {transform_indices = @transform_7, window_bounds = array<i64: 8, 16>}]} {
    %c0 = arith.constant 0 : index
    %c0_0 = arith.constant 0 : index
    %0 = vector.load %arg1[%c0, %c0_0] : memref<8x32xf32, #tpu.memory_space<vmem>>, vector<8x32xf32>
    %1 = arith.truncf %0 : vector<8x32xf32> to vector<8x32xbf16>
    %c0_1 = arith.constant 0 : index
    %c0_2 = arith.constant 0 : index
    %2 = vector.load %arg2[%c0_1, %c0_2] : memref<32x64xbf16, #tpu.memory_space<vmem>>, vector<32x64xbf16>
    %cst = arith.constant dense<0.000000e+00> : vector<8x64xf32>
    %3 = tpu.matmul %1, %2, %cst {dimension_numbers = #tpu.dot_dimension_numbers<[1], [0], [0], [1], [0, 0, 1, 1], [], []>} : vector<8x32xbf16>, vector<32x64xbf16>, vector<8x64xf32> -> vector<8x64xf32>
    %c0_3 = arith.constant 0 : index
    %c0_4 = arith.constant 0 : index
    %4 = vector.load %arg3[%c0_3, %c0_4] : memref<1x64xf32, #tpu.memory_space<vmem>>, vector<1x64xf32>
    %5 = vector.broadcast %4 : vector<1x64xf32> to vector<8x64xf32>
    %6 = arith.addf %3, %5 : vector<8x64xf32>
    %cst_5 = arith.constant 0.000000e+00 : f32
    %7 = vector.broadcast %cst_5 : f32 to vector<8x64xf32>
    %8 = arith.maximumf %6, %7 : vector<8x64xf32>
    %9 = arith.truncf %8 : vector<8x64xf32> to vector<8x64xbf16>
    %c0_6 = arith.constant 0 : index
    %c0_7 = arith.constant 0 : index
    %10 = vector.load %arg4[%c0_6, %c0_7] : memref<64x64xbf16, #tpu.memory_space<vmem>>, vector<64x64xbf16>
    %cst_8 = arith.constant dense<0.000000e+00> : vector<8x64xf32>
    %11 = tpu.matmul %9, %10, %cst_8 {dimension_numbers = #tpu.dot_dimension_numbers<[1], [0], [0], [1], [0, 0, 1, 1], [], []>} : vector<8x64xbf16>, vector<64x64xbf16>, vector<8x64xf32> -> vector<8x64xf32>
    %c0_9 = arith.constant 0 : index
    %c0_10 = arith.constant 0 : index
    %12 = vector.load %arg5[%c0_9, %c0_10] : memref<1x64xf32, #tpu.memory_space<vmem>>, vector<1x64xf32>
    %13 = vector.broadcast %12 : vector<1x64xf32> to vector<8x64xf32>
    %14 = arith.addf %11, %13 : vector<8x64xf32>
    %cst_11 = arith.constant 0.000000e+00 : f32
    %15 = vector.broadcast %cst_11 : f32 to vector<8x64xf32>
    %16 = arith.maximumf %14, %15 : vector<8x64xf32>
    %17 = arith.truncf %16 : vector<8x64xf32> to vector<8x64xbf16>
    %c0_12 = arith.constant 0 : index
    %c0_13 = arith.constant 0 : index
    %18 = vector.load %arg6[%c0_12, %c0_13] : memref<64x16xbf16, #tpu.memory_space<vmem>>, vector<64x16xbf16>
    %cst_14 = arith.constant dense<0.000000e+00> : vector<8x16xf32>
    %19 = tpu.matmul %17, %18, %cst_14 {dimension_numbers = #tpu.dot_dimension_numbers<[1], [0], [0], [1], [0, 0, 1, 1], [], []>} : vector<8x64xbf16>, vector<64x16xbf16>, vector<8x16xf32> -> vector<8x16xf32>
    %c0_15 = arith.constant 0 : index
    %c0_16 = arith.constant 0 : index
    %20 = vector.load %arg7[%c0_15, %c0_16] : memref<1x16xf32, #tpu.memory_space<vmem>>, vector<1x16xf32>
    %21 = vector.broadcast %20 : vector<1x16xf32> to vector<8x16xf32>
    %22 = arith.addf %19, %21 : vector<8x16xf32>
    %c0_17 = arith.constant 0 : index
    %c0_18 = arith.constant 0 : index
    %23 = vector.load %arg8[%c0_17, %c0_18] : memref<8x16xf32, #tpu.memory_space<vmem>>, vector<8x16xf32>
    tpu.vector_store %arg8[%c0_17, %c0_18], %22 {strides = array<i32>} : memref<8x16xf32, #tpu.memory_space<vmem>>, vector<8x16xf32>,
    return
  }
  func.func @transform_0(%arg0: i32) -> (i32, i32) {
    %c0_i32 = arith.constant 0 : i32
    %c0_i32_0 = arith.constant 0 : i32
    return %arg0, %c0_i32 : i32, i32
  }
  func.func @transform_1(%arg0: i32) -> (i32, i32) {
    %c0_i32 = arith.constant 0 : i32
    %c0_i32_0 = arith.constant 0 : i32
    %c0_i32_1 = arith.constant 0 : i32
    return %c0_i32, %c0_i32_0 : i32, i32
  }
  func.func @transform_2(%arg0: i32) -> (i32, i32) {
    %c0_i32 = arith.constant 0 : i32
    %c0_i32_0 = arith.constant 0 : i32
    %c0_i32_1 = arith.constant 0 : i32
    return %c0_i32, %c0_i32_0 : i32, i32
  }
  func.func @transform_3(%arg0: i32) -> (i32, i32) {
    %c0_i32 = arith.constant 0 : i32
    %c0_i32_0 = arith.constant 0 : i32
    %c0_i32_1 = arith.constant 0 : i32
    return %c0_i32, %c0_i32_0 : i32, i32
  }
  func.func @transform_4(%arg0: i32) -> (i32, i32) {
    %c0_i32 = arith.constant 0 : i32
    %c0_i32_0 = arith.constant 0 : i32
    %c0_i32_1 = arith.constant 0 : i32
    return %c0_i32, %c0_i32_0 : i32, i32
  }
  func.func @transform_5(%arg0: i32) -> (i32, i32) {
    %c0_i32 = arith.constant 0 : i32
    %c0_i32_0 = arith.constant 0 : i32
    %c0_i32_1 = arith.constant 0 : i32
    return %c0_i32, %c0_i32_0 : i32, i32
  }
  func.func @transform_6(%arg0: i32) -> (i32, i32) {
    %c0_i32 = arith.constant 0 : i32
    %c0_i32_0 = arith.constant 0 : i32
    %c0_i32_1 = arith.constant 0 : i32
    return %c0_i32, %c0_i32_0 : i32, i32
  }
  func.func @transform_7(%arg0: i32) -> (i32, i32) {
    %c0_i32 = arith.constant 0 : i32
    %c0_i32_0 = arith.constant 0 : i32
    return %arg0, %c0_i32 : i32, i32
  }
}

</mosaic_0001>

<llo_original>
// kernel: conditional_transform.1
$region0: #{conditional_transform.1}
  #allocation0 [shape = 'u32[]', space=smem, size = 0x4, offset = 0x4, fixed_abs, tag = 'smem constant byte address 0x4 - core index']
  #allocation1 [shape = 'u32[144,128]{1,0:T(1,128)}', space=vmem, size = 0x12000, scoped, tag = 'internal scratch']
  %s0 = inlined_call_operand.vmem [shape: f32[8,32], index: 0, kind: input, shape index: {}]
  %s1 = inlined_call_operand.vmem [shape: bf16[32,64], index: 1, kind: input, shape index: {}]
  %s2 = inlined_call_operand.vmem [shape: f32[1,64], index: 2, kind: input, shape index: {}]
  %s3 = inlined_call_operand.vmem [shape: bf16[64,64], index: 3, kind: input, shape index: {}]
  %s4 = inlined_call_operand.vmem [shape: f32[1,64], index: 4, kind: input, shape index: {}]
  %s5 = inlined_call_operand.vmem [shape: bf16[64,16], index: 5, kind: input, shape index: {}]
  %s6 = inlined_call_operand.vmem [shape: f32[1,16], index: 6, kind: input, shape index: {}]
  %s7 = inlined_call_operand.hbm [shape: f32[8,16], index: 7, kind: output, shape index: {}]
  %s8 = sld [smem:[#allocation0]]
  $region38: #{conditional_transform.1} parent=0
    _
  %s10 = ssub.s32 1, %s8
  %s11 = scalar_select 0, %s10, %s8
  $region1: #{conditional_transform.1} parent=0
    #allocation2 [shape = 'u8[4096]{0}', space=vmem, size = 0x1000, scoped, tag = 'output window, operand 0, single buffered']
    #allocation3 [shape = 's32[1]{0}', space=sflag, size = 0x4, scoped, tag = 'scoped memory for conditional_transform.1']
    %12 = vsyncpa [#allocation3], 0
    // Predicated region
    $region2: #{conditional_transform.1} parent=1 // pred_check
      _
    $region3: #{conditional_transform.1} parent=1 // pred_check_branch
      %14 = sbr.rel (0) target = $region5
    $region4: #{conditional_transform.1} parent=1 // pred_region
      _
    $region5: #{conditional_transform.1} parent=1 // pred_fallthru
      _
    // Predicated region
    $region6: #{conditional_transform.1} parent=1 // pred_check
      _
    $region7: #{conditional_transform.1} parent=1 // pred_check_branch
      %16 = sbr.rel (0) target = $region9
    $region8: #{conditional_transform.1} parent=1 // pred_region
      _
    $region9: #{conditional_transform.1} parent=1 // pred_fallthru
      _
    // Predicated region
    $region10: #{conditional_transform.1} parent=1 // pred_check
      _
    $region11: #{conditional_transform.1} parent=1 // pred_check_branch
      %18 = sbr.rel (0) target = $region13
    $region12: #{conditional_transform.1} parent=1 // pred_region
      _
    $region13: #{conditional_transform.1} parent=1 // pred_fallthru
      _
    // Predicated region
    $region14: #{conditional_transform.1} parent=1 // pred_check
      _
    $region15: #{conditional_transform.1} parent=1 // pred_check_branch
      %20 = sbr.rel (0) target = $region17
    $region16: #{conditional_transform.1} parent=1 // pred_region
      _
    $region17: #{conditional_transform.1} parent=1 // pred_fallthru
      _
    // Predicated region
    $region18: #{conditional_transform.1} parent=1 // pred_check
      _
    $region19: #{conditional_transform.1} parent=1 // pred_check_branch
      %22 = sbr.rel (0) target = $region21
    $region20: #{conditional_transform.1} parent=1 // pred_region
      _
    $region21: #{conditional_transform.1} parent=1 // pred_fallthru
      _
    // Predicated region
    $region22: #{conditional_transform.1} parent=1 // pred_check
      _
    $region23: #{conditional_transform.1} parent=1 // pred_check_branch
      %24 = sbr.rel (0) target = $region25
    $region24: #{conditional_transform.1} parent=1 // pred_region
      _
    $region25: #{conditional_transform.1} parent=1 // pred_fallthru
      _
    // Predicated region
    $region26: #{conditional_transform.1} parent=1 // pred_check
      _
    $region27: #{conditional_transform.1} parent=1 // pred_check_branch
      %26 = sbr.rel (0) target = $region29
    $region28: #{conditional_transform.1} parent=1 // pred_region
      _
    $region29: #{conditional_transform.1} parent=1 // pred_fallthru
      _
    %v28 = vld [vmem:[%s0] sm:$0xff]
    %v29 = vpack.c.bf16 %v28, %v28
    %v30 = vld [vmem:[%s1] sm:$0xf]
    %v31 = vld [vmem:[%s1 + $0x4] sm:$0xf]
    %v32 = vld [vmem:[%s1 + $0x8] sm:$0xf]
    %v33 = vld [vmem:[%s1 + $0xc] sm:$0xf]
    %v34 = vld [vmem:[%s2] sm:$0x1]
    %v36 = vlaneseq
    %v37 = vshrl.u32 %v36, 7
    %v38 = vsub.s32 0, %v37
    %v39 = vrot.slane %v34, %v38
    %v45 = vunpack.c.l.b16 %v30
    %v46 = vunpack.c.l.b16 %v31
    %v47 = vunpack.c.l.b16 %v32
    %v48 = vunpack.c.l.b16 %v33
    %v49 = vpack.c.b16 %v46, %v45
    %v50 = vpack.c.b16 %v48, %v47
    %vm53 = vcmask 261120
    %v55 = vsel %vm53, %v29, 0
    %57 = vmatprep.subr.bf16.mxu0 0
    %58 = vmatpush1.bf16.msra.mxu0 0
    %59 = vmatprep.subr.bf16.mxu0 0
    %60 = vmatpush1.bf16.msra.mxu0 0
    %61 = vmatprep.subr.bf16.mxu0 0
    %62 = vmatpush1.bf16.msra.mxu0 0
    %63 = vmatprep.subr.bf16.mxu0 0
    %64 = vmatpush1.bf16.msra.mxu0 0
    %65 = vmatprep.subr.bf16.mxu0 0
    %66 = vmatpush1.bf16.msra.mxu0 0
    %67 = vmatprep.subr.bf16.mxu0 0
    %68 = vmatpush1.bf16.msra.mxu0 0
    %69 = vmatprep.subr.bf16.mxu0 0
    %70 = vmatpush1.bf16.msra.mxu0 %v50
    %71 = vmatprep.subr.bf16.mxu0 0
    %72 = vmatpush1.bf16.msra.mxu0 %v49
    %73 = vmatprep.subr.bf16.mxu0 0
    %74 = vmatpush2.bf16.msra.mxu0 0
    %75 = vmatprep.subr.bf16.mxu0 0
    %76 = vmatpush2.bf16.msra.mxu0 0
    %77 = vmatprep.subr.bf16.mxu0 0
    %78 = vmatpush2.bf16.msra.mxu0 0
    %79 = vmatprep.subr.bf16.mxu0 0
    %80 = vmatpush2.bf16.msra.mxu0 0
    %81 = vmatprep.subr.bf16.mxu0 0
    %82 = vmatpush2.bf16.msra.mxu0 0
    %83 = vmatprep.subr.bf16.mxu0 0
    %84 = vmatpush2.bf16.msra.mxu0 0
    %85 = vmatprep.subr.bf16.mxu0 0
    %86 = vmatpush2.bf16.msra.mxu0 0
    %87 = vmatprep.subr.bf16.mxu0 0
    %88 = vmatpush2.bf16.msra.mxu0 0
    %89 = vmatprep.mubr.bf16.mxu0 0
    %90 = vmatmul.mubr.bf16.gmra.mxu0 %v55
    %v91 = vpop.f32.mrf.mxu0
    %v92 = vadd.f32 %v39, %v91
    %v93 = vpop.f32.mrf.mxu0
    %v94 = vpop.f32.mrf.mxu0
    %v95 = vpop.f32.mrf.mxu0
    %96 = vdwg.mxu0
    %v97 = vmax.f32 %v92, 0.0
    %v98 = vpack.c.bf16 %v97, %v97
    %v99 = vld [vmem:[%s3] sm:$0xf]
    %v100 = vld [vmem:[%s3 + $0x4] sm:$0xf]
    %v101 = vld [vmem:[%s3 + $0x8] sm:$0xf]
    %v102 = vld [vmem:[%s3 + $0xc] sm:$0xf]
    %v103 = vld [vmem:[%s3 + $0x10] sm:$0xf]
    %v104 = vld [vmem:[%s3 + $0x14] sm:$0xf]
    %v105 = vld [vmem:[%s3 + $0x18] sm:$0xf]
    %v106 = vld [vmem:[%s3 + $0x1c] sm:$0xf]
    %v107 = vld [vmem:[%s4] sm:$0x1]
    %v109 = vlaneseq
    %v110 = vshrl.u32 %v109, 7
    %v111 = vsub.s32 0, %v110
    %v112 = vrot.slane %v107, %v111
    %v122 = vunpack.c.l.b16 %v99
    %v123 = vunpack.c.l.b16 %v100
    %v124 = vunpack.c.l.b16 %v101
    %v125 = vunpack.c.l.b16 %v102
    %v126 = vunpack.c.l.b16 %v103
    %v127 = vunpack.c.l.b16 %v104
    %v128 = vunpack.c.l.b16 %v105
    %v129 = vunpack.c.l.b16 %v106
    %v130 = vpack.c.b16 %v123, %v122
    %v131 = vpack.c.b16 %v125, %v124
    %v132 = vpack.c.b16 %v127, %v126
    %v133 = vpack.c.b16 %v129, %v128
    %vm138 = vcmask 523264
    %v140 = vsel %vm138, %v98, 0
    %142 = vmatprep.subr.bf16.mxu0 0
    %143 = vmatpush1.bf16.msra.mxu0 0
    %144 = vmatprep.subr.bf16.mxu0 0
    %145 = vmatpush1.bf16.msra.mxu0 0
    %146 = vmatprep.subr.bf16.mxu0 0
    %147 = vmatpush1.bf16.msra.mxu0 0
    %148 = vmatprep.subr.bf16.mxu0 0
    %149 = vmatpush1.bf16.msra.mxu0 0
    %150 = vmatprep.subr.bf16.mxu0 0
    %151 = vmatpush1.bf16.msra.mxu0 %v133
    %152 = vmatprep.subr.bf16.mxu0 0
    %153 = vmatpush1.bf16.msra.mxu0 %v132
    %154 = vmatprep.subr.bf16.mxu0 0
    %155 = vmatpush1.bf16.msra.mxu0 %v131
    %156 = vmatprep.subr.bf16.mxu0 0
    %157 = vmatpush1.bf16.msra.mxu0 %v130
    %158 = vmatprep.subr.bf16.mxu0 0
    %159 = vmatpush2.bf16.msra.mxu0 0
    %160 = vmatprep.subr.bf16.mxu0 0
    %161 = vmatpush2.bf16.msra.mxu0 0
    %162 = vmatprep.subr.bf16.mxu0 0
    %163 = vmatpush2.bf16.msra.mxu0 0
    %164 = vmatprep.subr.bf16.mxu0 0
    %165 = vmatpush2.bf16.msra.mxu0 0
    %166 = vmatprep.subr.bf16.mxu0 0
    %167 = vmatpush2.bf16.msra.mxu0 0
    %168 = vmatprep.subr.bf16.mxu0 0
    %169 = vmatpush2.bf16.msra.mxu0 0
    %170 = vmatprep.subr.bf16.mxu0 0
    %171 = vmatpush2.bf16.msra.mxu0 0
    %172 = vmatprep.subr.bf16.mxu0 0
    %173 = vmatpush2.bf16.msra.mxu0 0
    %174 = vmatprep.mubr.bf16.mxu0 0
    %175 = vmatmul.mubr.bf16.gmra.mxu0 %v140
    %v176 = vpop.f32.mrf.mxu0
    %v177 = vadd.f32 %v112, %v176
    %v178 = vpop.f32.mrf.mxu0
    %v179 = vpop.f32.mrf.mxu0
    %v180 = vpop.f32.mrf.mxu0
    %181 = vdwg.mxu0
    %v182 = vmax.f32 %v177, 0.0
    %v183 = vpack.c.bf16 %v182, %v182
    %v184 = vld [vmem:[%s5] sm:$0xf]
    %v185 = vld [vmem:[%s5 + $0x4] sm:$0xf]
    %v186 = vld [vmem:[%s5 + $0x8] sm:$0xf]
    %v187 = vld [vmem:[%s5 + $0xc] sm:$0xf]
    %v188 = vld [vmem:[%s5 + $0x10] sm:$0xf]
    %v189 = vld [vmem:[%s5 + $0x14] sm:$0xf]
    %v190 = vld [vmem:[%s5 + $0x18] sm:$0xf]
    %v191 = vld [vmem:[%s5 + $0x1c] sm:$0xf]
    %v192 = vld [vmem:[%s6] sm:$0x1]
    %v194 = vlaneseq
    %v195 = vshrl.u32 %v194, 7
    %v196 = vsub.s32 0, %v195
    %v197 = vrot.slane %v192, %v196
    %v207 = vunpack.c.l.b16 %v184
    %v208 = vunpack.c.l.b16 %v185
    %v209 = vunpack.c.l.b16 %v186
    %v210 = vunpack.c.l.b16 %v187
    %v211 = vunpack.c.l.b16 %v188
    %v212 = vunpack.c.l.b16 %v189
    %v213 = vunpack.c.l.b16 %v190
    %v214 = vunpack.c.l.b16 %v191
    %v215 = vpack.c.b16 %v208, %v207
    %v216 = vpack.c.b16 %v210, %v209
    %v217 = vpack.c.b16 %v212, %v211
    %v218 = vpack.c.b16 %v214, %v213
    %v224 = vsel %vm138, %v183, 0
    %226 = vmatprep.subr.bf16.mxu0 0
    %227 = vmatpush1.bf16.msra.mxu0 0
    %228 = vmatprep.subr.bf16.mxu0 0
    %229 = vmatpush1.bf16.msra.mxu0 0
    %230 = vmatprep.subr.bf16.mxu0 0
    %231 = vmatpush1.bf16.msra.mxu0 0
    %232 = vmatprep.subr.bf16.mxu0 0
    %233 = vmatpush1.bf16.msra.mxu0 0
    %234 = vmatprep.subr.bf16.mxu0 0
    %235 = vmatpush1.bf16.msra.mxu0 %v218
    %236 = vmatprep.subr.bf16.mxu0 0
    %237 = vmatpush1.bf16.msra.mxu0 %v217
    %238 = vmatprep.subr.bf16.mxu0 0
    %239 = vmatpush1.bf16.msra.mxu0 %v216
    %240 = vmatprep.subr.bf16.mxu0 0
    %241 = vmatpush1.bf16.msra.mxu0 %v215
    %242 = vmatprep.subr.bf16.mxu0 0
    %243 = vmatpush2.bf16.msra.mxu0 0
    %244 = vmatprep.subr.bf16.mxu0 0
    %245 = vmatpush2.bf16.msra.mxu0 0
    %246 = vmatprep.subr.bf16.mxu0 0
    %247 = vmatpush2.bf16.msra.mxu0 0
    %248 = vmatprep.subr.bf16.mxu0 0
    %249 = vmatpush2.bf16.msra.mxu0 0
    %250 = vmatprep.subr.bf16.mxu0 0
    %251 = vmatpush2.bf16.msra.mxu0 0
    %252 = vmatprep.subr.bf16.mxu0 0
    %253 = vmatpush2.bf16.msra.mxu0 0
    %254 = vmatprep.subr.bf16.mxu0 0
    %255 = vmatpush2.bf16.msra.mxu0 0
    %256 = vmatprep.subr.bf16.mxu0 0
    %257 = vmatpush2.bf16.msra.mxu0 0
    %258 = vmatprep.mubr.bf16.mxu0 0
    %259 = vmatmul.mubr.bf16.gmra.mxu0 %v224
    %v260 = vpop.f32.mrf.mxu0
    %v261 = vadd.f32 %v197, %v260
    %v262 = vpop.f32.mrf.mxu0
    %v263 = vpop.f32.mrf.mxu0
    %v264 = vpop.f32.mrf.mxu0
    %265 = vdwg.mxu0
    %vm266 = vcmask 130048
    %267 = vst.msk [vmem:[#allocation2] sm:$0xff] %vm266, %v261
    // Predicated region
    $region30: #{conditional_transform.1} parent=1 // pred_check
      _
    $region31: #{conditional_transform.1} parent=1 // pred_check_branch
      %269 = sbr.rel (0) target = $region33
    $region32: #{conditional_transform.1} parent=1 // pred_region
      %s271 = ssub.s32 128, 128
      %272 = vsyncadd [#allocation3], %s271
      %s274 = sshll.u32 [#allocation2], 4
      %s275 = int_to_ptr.vmem [resolvable:$true] %s274
      %277 = dma.vmem_to_hbm [thread:$0]  %s275, 128, %s7, [#allocation3]
    $region33: #{conditional_transform.1} parent=1 // pred_fallthru
      _
    // Predicated region
    $region34: #{conditional_transform.1} parent=1 // pred_check
      _
    $region35: #{conditional_transform.1} parent=1 // pred_check_branch
      %279 = sbr.rel (0) target = $region37
    $region36: #{conditional_transform.1} parent=1 // pred_region
      %280 = dma.done [#allocation3], 128
    $region37: #{conditional_transform.1} parent=1 // pred_fallthru
      _
    %281 = vsyncpa [#allocation3], 1

</llo_original>
